<compile_context>
chip_gen: v7x
topology: tpu7x:2x2x1
jax: 0.10.0
libtpu: 0.0.40
codegen_flags: <defaults>
</compile_context>

<pallas_src>
import functools

import jax
import jax.numpy as jnp
from jax.experimental import pallas as pl
from jax.experimental.pallas import tpu as pltpu


_LANE_WIDTH = 512                      # lane-dense column width (multiple of 128)
_MAX_TILE_ROWS = 1024                  # 1024 x 512 fp32 = 2 MiB per block
_FUSED_MAX_BYTES = 4 * 1024 * 1024     # fuse reduce+quantize below this (fp32 bytes, padded)
_VMEM_LIMIT = 32 * 1024 * 1024         # safe on v5e/v6e (128 MiB) and v7x (64 MiB physical)


def _cdiv(a, b):
    return -(-a // b)


def _round_up(a, m):
    return _cdiv(a, m) * m


def _tiling(total, c, max_tile_rows):
    """Returns (rows_padded, tile_rows, steps) for a lane-dense (rows, c) view."""
    rows = _cdiv(total, c)
    if rows <= max_tile_rows:
        return rows, rows, 1                      # single full-array block
    steps = _cdiv(rows, max_tile_rows)
    tile_rows = _round_up(_cdiv(rows, steps), 8)  # balanced tiles, minimal padding
    return steps * tile_rows, tile_rows, steps


def _flatten_pad(x, rows_padded, c):
    """Flatten to 1-D, edge-pad (min/max neutral) and reshape to (rows_padded, c)."""
    flat = x.reshape(-1)
    total = flat.shape[0]
    padded = rows_padded * c
    if padded != total:
        flat = jnp.pad(flat, (0, padded - total), mode="edge")
    return flat.reshape(rows_padded, c)


# ---------------------------------------------------------------------------
# Kernel 1 (large tensors): tiled global min / max reduction.
#   grid = (n_parts, steps); n_parts partials let megacore chips (v7x) shard
#   the reduction across TensorCores; partials are combined in plain JAX.
# ---------------------------------------------------------------------------
def _minmax_kernel(x_ref, min_ref, max_ref, min_acc, max_acc):
    i = pl.program_id(1)
    x = x_ref[...].astype(jnp.float32)            # cast per-tile, not in HBM
    tile_min = jnp.min(x, axis=0, keepdims=True)  # (1, C)
    tile_max = jnp.max(x, axis=0, keepdims=True)  # (1, C)

    @pl.when(i == 0)
    def _():
        min_acc[...] = jnp.full_like(min_acc, jnp.inf)
        max_acc[...] = jnp.full_like(max_acc, -jnp.inf)

    min_acc[...] = jnp.minimum(min_acc[...], tile_min)
    max_acc[...] = jnp.maximum(max_acc[...], tile_max)

    @pl.when(i == pl.num_programs(1) - 1)
    def _():
        min_ref[...] = jnp.broadcast_to(min_acc[...], min_ref.shape)  # (8, C)
        max_ref[...] = jnp.broadcast_to(max_acc[...], max_ref.shape)


def global_min_max(x, *, c=_LANE_WIDTH, max_tile_rows=_MAX_TILE_ROWS):
    total = int(x.size)
    rows_padded, tile_rows, steps_total = _tiling(total, c, max_tile_rows)
    n_parts = 2 if steps_total >= 4 else 1        # 2 partials -> 2 TCs on v7x
    if n_parts > 1:
        steps = _cdiv(steps_total, n_parts)
        rows_padded = n_parts * steps * tile_rows
    else:
        steps = steps_total
    x2d = _flatten_pad(x, rows_padded, c)

    part_min, part_max = pl.pallas_call(
        _minmax_kernel,
        out_shape=(
            jax.ShapeDtypeStruct((n_parts * 8, c), jnp.float32),
            jax.ShapeDtypeStruct((n_parts * 8, c), jnp.float32),
        ),
        grid_spec=pltpu.PrefetchScalarGridSpec(
            num_scalar_prefetch=0,
            grid=(n_parts, steps),
            in_specs=[pl.BlockSpec((tile_rows, c),
                                   lambda p, i: (p * steps + i, 0))],
            out_specs=[
                pl.BlockSpec((8, c), lambda p, i: (p, 0)),
                pl.BlockSpec((8, c), lambda p, i: (p, 0)),
            ],
            scratch_shapes=[
                pltpu.VMEM((1, c), jnp.float32),
                pltpu.VMEM((1, c), jnp.float32),
            ],
        ),
        compiler_params=pltpu.CompilerParams(
            dimension_semantics=("parallel", "arbitrary"),
            vmem_limit_bytes=_VMEM_LIMIT,
        ),
    )(x2d)
    return jnp.min(part_min), jnp.max(part_max)   # scalar zero_point-min / max


# ---------------------------------------------------------------------------
# Kernel 2 (large tensors / eval): tiled element-wise fake-quantize.
#   params (SMEM, f32[4]) = [offset, inv_scale, scale, deq_offset]
#   q = round(clip((x + offset) * inv_scale, qmin, qmax)); deq: q*scale + deq_offset
# ---------------------------------------------------------------------------
def _quantize_kernel(params_ref, x_ref, o_ref, *, qmin, qmax, dequantize):
    offset = params_ref[0]        # qmin*scale - zero_point
    inv_scale = params_ref[1]     # 1/scale  (no per-element divide)
    scale = params_ref[2]
    deq_offset = params_ref[3]    # zero_point - qmin*scale
    x = x_ref[...].astype(jnp.float32)
    q = jnp.round(jnp.clip((x + offset) * inv_scale, qmin, qmax))
    if dequantize:
        q = q * scale + deq_offset
    o_ref[...] = q.astype(o_ref.dtype)


def quantize_apply(x, params, *, qmin, qmax, dequantize,
                   c=_LANE_WIDTH, max_tile_rows=_MAX_TILE_ROWS):
    orig_shape, orig_dtype = x.shape, x.dtype
    total = int(x.size)
    rows_padded, tile_rows, steps = _tiling(total, c, max_tile_rows)
    x2d = _flatten_pad(x, rows_padded, c)

    kernel = functools.partial(_quantize_kernel, qmin=qmin, qmax=qmax,
                               dequantize=dequantize)
    out2d = pl.pallas_call(
        kernel,
        out_shape=jax.ShapeDtypeStruct((rows_padded, c), orig_dtype),
        grid_spec=pltpu.PrefetchScalarGridSpec(
            num_scalar_prefetch=0,
            grid=(steps,),
            in_specs=[
                pl.BlockSpec(memory_space=pltpu.MemorySpace.SMEM),   # 4 scalars
                pl.BlockSpec((tile_rows, c), lambda i: (i, 0)),
            ],
            out_specs=pl.BlockSpec((tile_rows, c), lambda i: (i, 0)),
        ),
        compiler_params=pltpu.CompilerParams(
            dimension_semantics=("parallel",),
            vmem_limit_bytes=_VMEM_LIMIT,
        ),
    )(params.astype(jnp.float32), x2d)
    return out2d.reshape(-1)[:total].reshape(orig_shape)


# ---------------------------------------------------------------------------
# Kernel 3 (small/medium tensors): fused min/max + qparams + quantize.
#   Reads x from HBM exactly once; emits zero_point / range for the EMA.
# ---------------------------------------------------------------------------
def _fused_quant_kernel(x_ref, o_ref, zp_ref, rng_ref, *, qmin, qmax, dequantize):
    x = x_ref[...].astype(jnp.float32)
    mn = jnp.min(jnp.min(x, axis=0, keepdims=True), axis=1, keepdims=True)  # (1,1)
    mx = jnp.max(jnp.max(x, axis=0, keepdims=True), axis=1, keepdims=True)  # (1,1)
    zp = mn
    rng = mx - mn
    scale = jnp.maximum(rng / (qmax - qmin), 1e-8)
    inv_scale = 1.0 / scale
    offset = qmin * scale - zp
    q = jnp.round(jnp.clip((x + offset) * inv_scale, qmin, qmax))
    if dequantize:
        q = q * scale + (zp - qmin * scale)
    o_ref[...] = q.astype(o_ref.dtype)
    zp_ref[...] = zp
    rng_ref[...] = rng


def fused_quantize(x, *, qmin, qmax, dequantize, c=_LANE_WIDTH):
    orig_shape, orig_dtype = x.shape, x.dtype
    total = int(x.size)
    rows = _cdiv(total, c)
    x2d = _flatten_pad(x, rows, c)

    kernel = functools.partial(_fused_quant_kernel, qmin=qmin, qmax=qmax,
                               dequantize=dequantize)
    out2d, zp, rng = pl.pallas_call(
        kernel,
        out_shape=(
            jax.ShapeDtypeStruct((rows, c), orig_dtype),
            jax.ShapeDtypeStruct((1, 1), jnp.float32),
            jax.ShapeDtypeStruct((1, 1), jnp.float32),
        ),
        grid_spec=pltpu.PrefetchScalarGridSpec(
            num_scalar_prefetch=0,
            grid=(1,),
            in_specs=[pl.BlockSpec((rows, c), lambda i: (0, 0))],
            out_specs=[
                pl.BlockSpec((rows, c), lambda i: (0, 0)),
                pl.BlockSpec((1, 1), lambda i: (0, 0)),
                pl.BlockSpec((1, 1), lambda i: (0, 0)),
            ],
        ),
        compiler_params=pltpu.CompilerParams(
            dimension_semantics=("arbitrary",),
            vmem_limit_bytes=_VMEM_LIMIT,
        ),
    )(x2d)
    return (out2d.reshape(-1)[:total].reshape(orig_shape),
            zp.reshape(()), rng.reshape(()))


# ---------------------------------------------------------------------------
# QuantMeasure module (forward semantics of the PyTorch reference).
# ---------------------------------------------------------------------------
class QuantMeasure:
    def __init__(self, shape_measure=(1,), momentum=0.9, dequantize=True,
                 stochastic=False, measure=False,
                 fused_max_bytes=_FUSED_MAX_BYTES):
        # deterministic buffer init (matches register_buffer(torch.zeros(...)))
        self.running_zero_point = jnp.zeros(shape_measure, jnp.float32)
        self.running_range = jnp.zeros(shape_measure, jnp.float32)
        self.momentum = momentum
        self.dequantize = dequantize
        # TODO(synk): stochastic=True (uniform(-0.5,0.5) noise before round) not
        # implemented; default False path only (would use pltpu.prng_random_bits).
        self.stochastic = stochastic
        self.measure = measure
        self.training = True
        self.fused_max_bytes = fused_max_bytes
        if self.measure:
            self.num_measured = jnp.zeros((1,), jnp.float32)

    @staticmethod
    def _make_params(zp, rng, qmin, qmax):
        scale = jnp.maximum(rng / (qmax - qmin), 1e-8)
        inv_scale = 1.0 / scale
        offset = qmin * scale - zp
        deq_offset = zp - qmin * scale
        return jnp.stack([offset, inv_scale, scale, deq_offset]).astype(jnp.float32)

    def __call__(self, x, num_bits):
        # qmin/qmax for unsigned quantization (signed=False path of the reference)
        qmin = 0.0
        qmax = qmin + 2.0 ** num_bits - 1.0

        if self.training or self.measure:
            if self.measure:
                momentum = self.num_measured / (self.num_measured + 1.0)
                self.num_measured = self.num_measured + 1.0
            else:
                momentum = self.momentum

            padded_f32_bytes = _cdiv(int(x.size), _LANE_WIDTH) * _LANE_WIDTH * 4
            use_fused = (not self.measure) and (padded_f32_bytes <= self.fused_max_bytes)

            if use_fused:
                q, zp, rng = fused_quantize(
                    x, qmin=qmin, qmax=qmax, dequantize=self.dequantize)
            else:
                mn, mx = global_min_max(x)
                zp, rng = mn, mx - mn
                q = None

            self.running_zero_point = (
                self.running_zero_point * momentum + zp * (1.0 - momentum))
            self.running_range = (
                self.running_range * momentum + rng * (1.0 - momentum))

            if self.measure:
                return x
            if q is None:
                params = self._make_params(zp, rng, qmin, qmax)
                q = quantize_apply(x, params, qmin=qmin, qmax=qmax,
                                   dequantize=self.dequantize)
            return q
        else:
            zp = self.running_zero_point.reshape(-1)[0]
            rng = self.running_range.reshape(-1)[0]
            params = self._make_params(zp, rng, qmin, qmax)
            return quantize_apply(x, params, qmin=qmin, qmax=qmax,
                                  dequantize=self.dequantize)


# ---------------------------------------------------------------------------
# Pure-JAX references for correctness checking.
# ---------------------------------------------------------------------------
def _reference_quantize(x, zp, rng, num_bits, dequantize=True):
    """Same math as the kernels (fp32, multiply-by-reciprocal)."""
    qmin = 0.0
    qmax = qmin + 2.0 ** num_bits - 1.0
    scale = jnp.maximum(rng / (qmax - qmin), 1e-8)
    inv_scale = 1.0 / scale
    q = jnp.round(jnp.clip((x.astype(jnp.float32) + (qmin * scale - zp)) * inv_scale,
                           qmin, qmax))
    if dequantize:
        q = q * scale + (zp - qmin * scale)
    return q.astype(x.dtype)


def _reference_quantize_div(x, zp, rng, num_bits, dequantize=True):
    """Exact-division semantics of the PyTorch reference (sanity check)."""
    qmin = 0.0
    qmax = qmin + 2.0 ** num_bits - 1.0
    scale = jnp.maximum(rng / (qmax - qmin), 1e-8)
    q = jnp.round(jnp.clip((x + qmin * scale - zp) / scale, qmin, qmax))
    if dequantize:
        q = q * scale + (zp - qmin * scale)
    return q


if __name__ == "__main__":
    key = jax.random.PRNGKey(0)
    N, D = 50, 37            # deliberately lane-unaligned: exercises flatten + edge padding
    num_bits = 8
    x = jax.random.normal(key, (N, D), dtype=jnp.float32) * 3.0 + 0.5

    mn = jnp.min(x)
    mx = jnp.max(x)
    zp_ref, rng_ref = mn, mx - mn
    scale_ref = jnp.maximum(rng_ref / (2.0 ** num_bits - 1.0), 1e-8)
    ref = _reference_quantize(x, zp_ref, rng_ref, num_bits)
    ref_div = _reference_quantize_div(x, zp_ref, rng_ref, num_bits)

    # --- training, fused single-pass path ---
    qm = QuantMeasure(shape_measure=(1,), momentum=0.9)
    q_fused = jax.block_until_ready(qm(x, num_bits))
    assert q_fused.shape == x.shape and q_fused.dtype == x.dtype
    assert jnp.allclose(q_fused, ref, atol=1e-5, rtol=1e-5)
    # within one quantum of exact-division semantics
    assert float(jnp.max(jnp.abs(q_fused - ref_div))) <= float(1.01 * scale_ref + 1e-6)
    assert jnp.allclose(qm.running_zero_point, 0.1 * zp_ref, atol=1e-6)
    assert jnp.allclose(qm.running_range, 0.1 * rng_ref, atol=1e-6)

    # --- training, two-pass (tiled min/max reduce + tiled quantize) path ---
    qm2 = QuantMeasure(shape_measure=(1,), momentum=0.9, fused_max_bytes=0)
    q_two_pass = jax.block_until_ready(qm2(x, num_bits))
    assert jnp.allclose(q_two_pass, q_fused, atol=1e-5, rtol=1e-5)
    assert jnp.allclose(qm2.running_range, 0.1 * rng_ref, atol=1e-6)

    # --- eval path: quantize from running buffers (SMEM scalar params) ---
    qm.training = False
    q_eval = jax.block_until_ready(qm(x, num_bits))
    ref_eval = _reference_quantize(
        x, qm.running_zero_point[0], qm.running_range[0], num_bits)
    assert jnp.allclose(q_eval, ref_eval, atol=1e-5, rtol=1e-5)

    print("KERNEL_OK")
</pallas_src>

<mosaic_0001>
module attributes {stable_mosaic.version = 11 : i64} {
  func.func @_fused_quant_kernel(%arg0: i32, %arg1: memref<4x512xf32, #tpu.memory_space<vmem>>, %arg2: memref<4x512xf32, #tpu.memory_space<vmem>>, %arg3: memref<1x1xf32, #tpu.memory_space<vmem>>, %arg4: memref<1x1xf32, #tpu.memory_space<vmem>>) attributes {dimension_semantics = [#tpu.dimension_semantics<arbitrary>], iteration_bounds = array<i64: 1>, scalar_prefetch = 0 : i64, scratch_operands = 0 : i64, tpu.core_type = #tpu.core_type<tc>, window_params = [{pipeline_mode = #tpu.pipeline_mode<synchronous>, transform_indices = @transform_0, window_bounds = array<i64: 4, 512>}, {pipeline_mode = #tpu.pipeline_mode<synchronous>, transform_indices = @transform_1, window_bounds = array<i64: 4, 512>}, {pipeline_mode = #tpu.pipeline_mode<synchronous>, transform_indices = @transform_2, window_bounds = array<i64: 1, 1>}, {pipeline_mode = #tpu.pipeline_mode<synchronous>, transform_indices = @transform_3, window_bounds = array<i64: 1, 1>}]} {
    %c0 = arith.constant 0 : index
    %c0_0 = arith.constant 0 : index
    %0 = vector.load %arg1[%c0, %c0_0] : memref<4x512xf32, #tpu.memory_space<vmem>>, vector<4x512xf32>
    %cst = arith.constant dense<0x7F800000> : vector<512xf32>
    %1 = vector.multi_reduction <minimumf>, %0, %cst [0] : vector<4x512xf32> to vector<512xf32>
    %2 = vector.shape_cast %1 : vector<512xf32> to vector<1x512xf32>
    %cst_1 = arith.constant dense<0x7F800000> : vector<1xf32>
    %3 = vector.multi_reduction <minimumf>, %2, %cst_1 [1] : vector<1x512xf32> to vector<1xf32>
    %4 = vector.shape_cast %3 : vector<1xf32> to vector<1x1xf32>
    %cst_2 = arith.constant dense<0xFF800000> : vector<512xf32>
    %5 = vector.multi_reduction <maximumf>, %0, %cst_2 [0] : vector<4x512xf32> to vector<512xf32>
    %6 = vector.shape_cast %5 : vector<512xf32> to vector<1x512xf32>
    %cst_3 = arith.constant dense<0xFF800000> : vector<1xf32>
    %7 = vector.multi_reduction <maximumf>, %6, %cst_3 [1] : vector<1x512xf32> to vector<1xf32>
    %8 = vector.shape_cast %7 : vector<1xf32> to vector<1x1xf32>
    %9 = arith.subf %8, %4 : vector<1x1xf32>
    %cst_4 = arith.constant 2.550000e+02 : f32
    %10 = vector.broadcast %cst_4 : f32 to vector<1x1xf32>
    %11 = arith.divf %9, %10 : vector<1x1xf32>
    %cst_5 = arith.constant 9.99999993E-9 : f32
    %12 = vector.broadcast %cst_5 : f32 to vector<1x1xf32>
    %13 = arith.maximumf %11, %12 : vector<1x1xf32>
    %cst_6 = arith.constant 1.000000e+00 : f32
    %14 = vector.broadcast %cst_6 : f32 to vector<1x1xf32>
    %15 = arith.divf %14, %13 : vector<1x1xf32>
    %cst_7 = arith.constant 0.000000e+00 : f32
    %16 = vector.broadcast %cst_7 : f32 to vector<1x1xf32>
    %17 = arith.mulf %16, %13 : vector<1x1xf32>
    %18 = arith.subf %17, %4 : vector<1x1xf32>
    %19 = vector.broadcast %18 : vector<1x1xf32> to vector<4x512xf32>
    %20 = arith.addf %0, %19 : vector<4x512xf32>
    %21 = vector.broadcast %15 : vector<1x1xf32> to vector<4x512xf32>
    %22 = arith.mulf %20, %21 : vector<4x512xf32>
    %cst_8 = arith.constant 0.000000e+00 : f32
    %cst_9 = arith.constant 2.550000e+02 : f32
    %23 = vector.broadcast %cst_8 : f32 to vector<4x512xf32>
    %24 = arith.maximumf %23, %22 : vector<4x512xf32>
    %25 = vector.broadcast %cst_9 : f32 to vector<4x512xf32>
    %26 = arith.minimumf %25, %24 : vector<4x512xf32>
    %27 = math.roundeven %26 : vector<4x512xf32>
    %28 = vector.broadcast %13 : vector<1x1xf32> to vector<4x512xf32>
    %29 = arith.mulf %27, %28 : vector<4x512xf32>
    %cst_10 = arith.constant 0.000000e+00 : f32
    %30 = vector.broadcast %cst_10 : f32 to vector<1x1xf32>
    %31 = arith.mulf %30, %13 : vector<1x1xf32>
    %32 = arith.subf %4, %31 : vector<1x1xf32>
    %33 = vector.broadcast %32 : vector<1x1xf32> to vector<4x512xf32>
    %34 = arith.addf %29, %33 : vector<4x512xf32>
    %c0_11 = arith.constant 0 : index
    %c0_12 = arith.constant 0 : index
    %35 = vector.load %arg2[%c0_11, %c0_12] : memref<4x512xf32, #tpu.memory_space<vmem>>, vector<4x512xf32>
    tpu.vector_store %arg2[%c0_11, %c0_12], %34 {strides = array<i32>} : memref<4x512xf32, #tpu.memory_space<vmem>>, vector<4x512xf32>,
    %c0_13 = arith.constant 0 : index
    %c0_14 = arith.constant 0 : index
    %36 = vector.load %arg3[%c0_13, %c0_14] : memref<1x1xf32, #tpu.memory_space<vmem>>, vector<1x1xf32>
    tpu.vector_store %arg3[%c0_13, %c0_14], %4 {strides = array<i32>} : memref<1x1xf32, #tpu.memory_space<vmem>>, vector<1x1xf32>,
    %c0_15 = arith.constant 0 : index
    %c0_16 = arith.constant 0 : index
    %37 = vector.load %arg4[%c0_15, %c0_16] : memref<1x1xf32, #tpu.memory_space<vmem>>, vector<1x1xf32>
    tpu.vector_store %arg4[%c0_15, %c0_16], %9 {strides = array<i32>} : memref<1x1xf32, #tpu.memory_space<vmem>>, vector<1x1xf32>,
    return
  }
  func.func @transform_0(%arg0: i32) -> (i32, i32) {
    %c0_i32 = arith.constant 0 : i32
    %c0_i32_0 = arith.constant 0 : i32
    %c0_i32_1 = arith.constant 0 : i32
    return %c0_i32, %c0_i32_0 : i32, i32
  }
  func.func @transform_1(%arg0: i32) -> (i32, i32) {
    %c0_i32 = arith.constant 0 : i32
    %c0_i32_0 = arith.constant 0 : i32
    %c0_i32_1 = arith.constant 0 : i32
    return %c0_i32, %c0_i32_0 : i32, i32
  }
  func.func @transform_2(%arg0: i32) -> (i32, i32) {
    %c0_i32 = arith.constant 0 : i32
    %c0_i32_0 = arith.constant 0 : i32
    %c0_i32_1 = arith.constant 0 : i32
    return %c0_i32, %c0_i32_0 : i32, i32
  }
  func.func @transform_3(%arg0: i32) -> (i32, i32) {
    %c0_i32 = arith.constant 0 : i32
    %c0_i32_0 = arith.constant 0 : i32
    %c0_i32_1 = arith.constant 0 : i32
    return %c0_i32, %c0_i32_0 : i32, i32
  }
}

</mosaic_0001>

<llo_original>
// kernel: tpu_custom_call.1
$region0: #{tpu_custom_call.1}
  #allocation0 [shape = 'u32[]', space=smem, size = 0x4, offset = 0x4, fixed_abs, tag = 'smem constant byte address 0x4 - core index']
  #allocation1 [shape = 'u32[144,128]{1,0:T(1,128)}', space=vmem, size = 0x12000, scoped, tag = 'internal scratch']
  %s0 = inlined_call_operand.hbm [shape: f32[4,512], index: 0, kind: input, shape index: {}]
  %s1 = inlined_call_operand.hbm [shape: f32[4,512], index: 1, kind: output, shape index: {0}]
  %s2 = inlined_call_operand.hbm [shape: f32[1,1], index: 2, kind: output, shape index: {1}]
  %s3 = inlined_call_operand.hbm [shape: f32[1,1], index: 3, kind: output, shape index: {2}]
  %4 = xla_tuple %s1, %s2, %s3
  %s5 = sld [smem:[#allocation0]]
  $region34: #{tpu_custom_call.1} parent=0
    _
  %s7 = ssub.s32 1, %s5
  %s8 = scalar_select 0, %s7, %s5
  $region1: #{tpu_custom_call.1} parent=0
    #allocation2 [shape = 'u8[8192]{0}', space=vmem, size = 0x2000, scoped, tag = 'input window, operand 0, single buffered']
    #allocation3 [shape = 's32[1]{0}', space=sflag, size = 0x4, scoped, tag = 'scoped memory for tpu_custom_call.1']
    #allocation4 [shape = 's32[1]{0}', space=sflag, size = 0x4, scoped, tag = 'scoped memory for tpu_custom_call.1']
    #allocation5 [shape = 'u8[8192]{0}', space=vmem, size = 0x2000, scoped, tag = 'output window, operand 0, single buffered']
    #allocation6 [shape = 'u8[512]{0}', space=vmem, size = 0x400, scoped, tag = 'output window, operand 1, single buffered']
    #allocation7 [shape = 's32[1]{0}', space=sflag, size = 0x4, scoped, tag = 'scoped memory for tpu_custom_call.1']
    #allocation8 [shape = 'u8[512]{0}', space=vmem, size = 0x400, scoped, tag = 'output window, operand 2, single buffered']
    %9 = vsyncpa [#allocation3], 0
    %10 = vsyncpa [#allocation4], 0
    %11 = vsyncpa [#allocation7], 0
    // Predicated region
    $region2: #{tpu_custom_call.1} parent=1 // pred_check
      _
    $region3: #{tpu_custom_call.1} parent=1 // pred_check_branch
      %13 = sbr.rel (0) target = $region5
    $region4: #{tpu_custom_call.1} parent=1 // pred_region
      %s15 = ssub.s32 256, 256
      %16 = vsyncadd [#allocation3], %s15
      %s18 = sshll.u32 [#allocation2], 4
      %s19 = int_to_ptr.vmem [resolvable:$true] %s18
      %21 = dma.hbm_to_vmem [thread:$0]  %s0, 256, %s19, [#allocation3]
    $region5: #{tpu_custom_call.1} parent=1 // pred_fallthru
      _
    // Predicated region
    $region6: #{tpu_custom_call.1} parent=1 // pred_check
      _
    $region7: #{tpu_custom_call.1} parent=1 // pred_check_branch
      %23 = sbr.rel (0) target = $region9
    $region8: #{tpu_custom_call.1} parent=1 // pred_region
      %24 = dma.done [#allocation3], 256
    $region9: #{tpu_custom_call.1} parent=1 // pred_fallthru
      _
    %v25 = vld [vmem:[#allocation2] sm:$0xff]
    %v26 = vld [vmem:[#allocation2 + $0x8] sm:$0xff]
    %v29 = vcombine.high %v25, %v25
    %v30 = vcombine.high %v26, %v26
    %vm33 = vcmask 1043456
    %v34 = vsel %vm33, %v25, inf
    %v35 = vrot.slane %v34, 4
    %v36 = vmin.f32 %v34, %v35
    %v37 = vrot.slane %v36, 2
    %v38 = vmin.f32 %v36, %v37
    %v39 = vrot.slane %v38, 1
    %v40 = vmin.f32 %v38, %v39
    %v41 = vsel %vm33, %v29, inf
    %v42 = vrot.slane %v41, 4
    %v43 = vmin.f32 %v41, %v42
    %v44 = vrot.slane %v43, 2
    %v45 = vmin.f32 %v43, %v44
    %v46 = vrot.slane %v45, 1
    %v47 = vmin.f32 %v45, %v46
    %v48 = vsel %vm33, %v26, inf
    %v49 = vrot.slane %v48, 4
    %v50 = vmin.f32 %v48, %v49
    %v51 = vrot.slane %v50, 2
    %v52 = vmin.f32 %v50, %v51
    %v53 = vrot.slane %v52, 1
    %v54 = vmin.f32 %v52, %v53
    %v55 = vsel %vm33, %v30, inf
    %v56 = vrot.slane %v55, 4
    %v57 = vmin.f32 %v55, %v56
    %v58 = vrot.slane %v57, 2
    %v59 = vmin.f32 %v57, %v58
    %v60 = vrot.slane %v59, 1
    %v61 = vmin.f32 %v59, %v60
    %v62 = vmin.f32 %v40, %v47
    %v63 = vmin.f32 %v54, %v61
    %v64 = vmin.f32 %v62, %v63
    %65 = vmin.xlane.f32.xlu0 %v64
    %v66 = vpop.xlane.xlu0 %65
    %v67 = vsel %vm33, %v25, -inf
    %v68 = vrot.slane %v67, 4
    %v69 = vmax.f32 %v67, %v68
    %v70 = vrot.slane %v69, 2
    %v71 = vmax.f32 %v69, %v70
    %v72 = vrot.slane %v71, 1
    %v73 = vmax.f32 %v71, %v72
    %v74 = vsel %vm33, %v29, -inf
    %v75 = vrot.slane %v74, 4
    %v76 = vmax.f32 %v74, %v75
    %v77 = vrot.slane %v76, 2
    %v78 = vmax.f32 %v76, %v77
    %v79 = vrot.slane %v78, 1
    %v80 = vmax.f32 %v78, %v79
    %v81 = vsel %vm33, %v26, -inf
    %v82 = vrot.slane %v81, 4
    %v83 = vmax.f32 %v81, %v82
    %v84 = vrot.slane %v83, 2
    %v85 = vmax.f32 %v83, %v84
    %v86 = vrot.slane %v85, 1
    %v87 = vmax.f32 %v85, %v86
    %v88 = vsel %vm33, %v30, -inf
    %v89 = vrot.slane %v88, 4
    %v90 = vmax.f32 %v88, %v89
    %v91 = vrot.slane %v90, 2
    %v92 = vmax.f32 %v90, %v91
    %v93 = vrot.slane %v92, 1
    %v94 = vmax.f32 %v92, %v93
    %v95 = vmax.f32 %v73, %v80
    %v96 = vmax.f32 %v87, %v94
    %v97 = vmax.f32 %v95, %v96
    %98 = vmax.xlane.f32.xlu0 %v97
    %v99 = vpop.xlane.xlu0 %98
    %v100 = vsub.f32 %v99, %v66
    %v101 = vrcp.pop 255.0
    %v102 = vmul.f32 %v100, %v101
    %v103 = vmax.f32 %v102, 1e-08
    %v104 = vrcp.pop %v103
    %v105 = vmul.f32 1.0, %v104
    %v106 = vmul.f32 %v103, 0.0
    %v107 = vsub.f32 %v106, %v66
    %v108 = vadd.f32 %v25, %v107
    %v109 = vadd.f32 %v26, %v107
    %v110 = vmul.f32 %v108, %v105
    %v111 = vmul.f32 %v109, %v105
    %v112 = vmax.f32 %v110, 0.0
    %v113 = vmax.f32 %v111, 0.0
    %v114 = vmin.f32 %v112, 255.0
    %v115 = vmin.f32 %v113, 255.0
    %v116 = vround.ne.pseudo %v114
    %v117 = vround.ne.pseudo %v115
    %v118 = vmul.f32 %v116, %v103
    %v119 = vmul.f32 %v117, %v103
    %v120 = vsub.f32 %v66, %v106
    %v121 = vadd.f32 %v118, %v120
    %v122 = vadd.f32 %v119, %v120
    %123 = vst [vmem:[#allocation5] sm:$0xff] %v121
    %124 = vst [vmem:[#allocation5 + $0x8] sm:$0xff] %v122
    %vm125 = vcmask 0
    %126 = vst.msk [vmem:[#allocation6] sm:$0x1] %vm125, %v66
    %127 = vst.msk [vmem:[#allocation8] sm:$0x1] %vm125, %v100
    // Predicated region
    $region10: #{tpu_custom_call.1} parent=1 // pred_check
      _
    $region11: #{tpu_custom_call.1} parent=1 // pred_check_branch
      %129 = sbr.rel (0) target = $region13
    $region12: #{tpu_custom_call.1} parent=1 // pred_region
      %s131 = ssub.s32 256, 256
      %132 = vsyncadd [#allocation4], %s131
      %s134 = sshll.u32 [#allocation5], 4
      %s135 = int_to_ptr.vmem [resolvable:$true] %s134
      %137 = dma.vmem_to_hbm [thread:$0]  %s135, 256, %s1, [#allocation4]
    $region13: #{tpu_custom_call.1} parent=1 // pred_fallthru
      _
    // Predicated region
    $region14: #{tpu_custom_call.1} parent=1 // pred_check
      _
    $region15: #{tpu_custom_call.1} parent=1 // pred_check_branch
      %139 = sbr.rel (0) target = $region17
    $region16: #{tpu_custom_call.1} parent=1 // pred_region
      %s141 = ssub.s32 16, 16
      %142 = vsyncadd [#allocation7], %s141
      %s144 = sshll.u32 [#allocation6], 4
      %s145 = int_to_ptr.vmem [resolvable:$true] %s144
      %147 = dma.vmem_to_hbm [thread:$0]  %s145, 16, %s2, [#allocation7]
    $region17: #{tpu_custom_call.1} parent=1 // pred_fallthru
      _
    // Predicated region
    $region18: #{tpu_custom_call.1} parent=1 // pred_check
      _
    $region19: #{tpu_custom_call.1} parent=1 // pred_check_branch
      %149 = sbr.rel (0) target = $region21
    $region20: #{tpu_custom_call.1} parent=1 // pred_region
      %s151 = ssub.s32 16, 16
      %152 = vsyncadd [#allocation7], %s151
      %s154 = sshll.u32 [#allocation8], 4
      %s155 = int_to_ptr.vmem [resolvable:$true] %s154
      %157 = dma.vmem_to_hbm [thread:$0]  %s155, 16, %s3, [#allocation7]
    $region21: #{tpu_custom_call.1} parent=1 // pred_fallthru
      _
    // Predicated region
    $region22: #{tpu_custom_call.1} parent=1 // pred_check
      _
    $region23: #{tpu_custom_call.1} parent=1 // pred_check_branch
      %159 = sbr.rel (0) target = $region25
    $region24: #{tpu_custom_call.1} parent=1 // pred_region
      %160 = dma.done [#allocation4], 256
    $region25: #{tpu_custom_call.1} parent=1 // pred_fallthru
      _
    // Predicated region
    $region26: #{tpu_custom_call.1} parent=1 // pred_check
      _
    $region27: #{tpu_custom_call.1} parent=1 // pred_check_branch
      %162 = sbr.rel (0) target = $region29
    $region28: #{tpu_custom_call.1} parent=1 // pred_region
      %163 = dma.done [#allocation7], 16
    $region29: #{tpu_custom_call.1} parent=1 // pred_fallthru
      _
    // Predicated region
    $region30: #{tpu_custom_call.1} parent=1 // pred_check
      _
    $region31: #{tpu_custom_call.1} parent=1 // pred_check_branch
      %165 = sbr.rel (0) target = $region33
    $region32: #{tpu_custom_call.1} parent=1 // pred_region
      %166 = dma.done [#allocation7], 16
    $region33: #{tpu_custom_call.1} parent=1 // pred_fallthru
      _
    %167 = vsyncpa [#allocation3], 1
    %168 = vsyncpa [#allocation4], 1
    %169 = vsyncpa [#allocation7], 1

</llo_original>
